<compile_context>
chip_gen: v7x
topology: tpu7x:2x2x1
jax: 0.10.0
libtpu: 0.0.40
codegen_flags: <defaults>
</compile_context>

<pallas_src>
import jax
import jax.numpy as jnp
from jax.experimental import pallas as pl
from jax.experimental.pallas import tpu as pltpu


def _round_up(n, m):
    return ((n + m - 1) // m) * m


def _pe_mlp_kernel(x_ref, encp_ref, w1x_ref, w2_ref, b2_ref, o_ref):
    # x_ref:    (tm, K)  current row tile of the input (batch dim squeezed)
    # encp_ref: (tm, K)  precomputed enc @ w1[K:] + b1 (batch-invariant)
    # w1x_ref:  (K, K)   top half of the first Linear's weight
    # w2_ref:   (K, K),  b2_ref: (1, K)
    # o_ref:    (tm, K)
    h = jnp.dot(x_ref[...], w1x_ref[...], preferred_element_type=jnp.float32)
    h = jnp.maximum(h + encp_ref[...], 0.0)                       # ReLU(Linear1)
    o = jnp.dot(h, w2_ref[...], preferred_element_type=jnp.float32)
    o = jnp.maximum(o + b2_ref[...], 0.0)                         # ReLU(Linear2)
    o_ref[...] = o.astype(o_ref.dtype)


def learned_positional_encoder(x, enc, w1, b1, w2, b2, *, tile_rows=512):
    """x: (B, H, W, K) float32. enc: (H, W, K) already L2-normalized over K.

    Weights stored as (in, out): w1 (2K, K), w2 (K, K); biases (K,).
    Computes relu(relu(concat([x, enc]) @ w1 + b1) @ w2 + b2) exactly, via
    the algebraically equivalent split  x @ w1[:K] + (enc @ w1[K:] + b1).
    """
    B, H, W, K = x.shape
    HW = H * W

    x_flat = x.reshape(B, HW, K)
    enc_flat = enc.reshape(HW, K)

    # Batch-invariant precompute (exactly equivalent to the concat matmul).
    w1_x = w1[:K]
    enc_proj = (
        jnp.dot(enc_flat, w1[K:], precision=jax.lax.Precision.HIGHEST)
        + b1[None, :]
    ).astype(jnp.float32)
    b2_2d = b2.reshape(1, K)

    # Tile sizing: big row tiles, capped at the (8-aligned) spatial extent,
    # pad a ragged tail instead of asserting divisibility.
    tm = _round_up(min(int(tile_rows), _round_up(HW, 8)), 8)
    HW_pad = _round_up(HW, tm)
    if HW_pad != HW:
        pad = HW_pad - HW
        x_flat = jnp.pad(x_flat, ((0, 0), (0, pad), (0, 0)))
        enc_proj = jnp.pad(enc_proj, ((0, pad), (0, 0)))

    n_tiles = HW_pad // tm
    # Batch innermost: enc_proj's block index is constant across consecutive
    # steps, so it stays VMEM-resident instead of being re-fetched B times.
    grid = (n_tiles, B)

    out_flat = pl.pallas_call(
        _pe_mlp_kernel,
        out_shape=jax.ShapeDtypeStruct((B, HW_pad, K), x.dtype),
        grid_spec=pltpu.PrefetchScalarGridSpec(
            num_scalar_prefetch=0,
            grid=grid,
            in_specs=[
                # x tile: one batch element, one row tile
                pl.BlockSpec((pl.Squeezed(), tm, K), lambda i, b: (b, i, 0)),
                # enc_proj tile: shared across batch (index ignores b)
                pl.BlockSpec((tm, K), lambda i, b: (i, 0)),
                # full (small) weight / bias tensors every step
                pl.BlockSpec((K, K), lambda i, b: (0, 0)),
                pl.BlockSpec((K, K), lambda i, b: (0, 0)),
                pl.BlockSpec((1, K), lambda i, b: (0, 0)),
            ],
            out_specs=pl.BlockSpec(
                (pl.Squeezed(), tm, K), lambda i, b: (b, i, 0)
            ),
        ),
        compiler_params=pltpu.CompilerParams(
            dimension_semantics=("parallel", "parallel")
        ),
    )(x_flat, enc_proj, w1_x, w2, b2_2d)

    return out_flat[:, :HW, :].reshape(B, H, W, K)


def _reference(x, enc, w1, b1, w2, b2):
    # Direct transcription of the PyTorch forward (concat -> MLP).
    xe = jnp.concatenate([x, jnp.broadcast_to(enc[None], x.shape)], axis=3)
    h = jnp.maximum(xe @ w1 + b1, 0.0)
    return jnp.maximum(h @ w2 + b2, 0.0)


if __name__ == "__main__":
    # Small shapes consistent with the module's forward.
    B, H, W, K = 2, 8, 16, 32

    key = jax.random.PRNGKey(0)
    k_enc, k_x, k_w1, k_b1, k_w2, k_b2 = jax.random.split(key, 6)

    # Parameter init (matches __init__ shapes; values are synthetic/deterministic).
    enc_raw = jax.random.normal(k_enc, (H, W, K), dtype=jnp.float32)
    enc = enc_raw / jnp.linalg.norm(enc_raw, ord=2, axis=2, keepdims=True)

    # nn.Linear(2k, k) and nn.Linear(k, k); stored as (in, out) for x @ W + b.
    bound1 = 1.0 / jnp.sqrt(2 * K)
    w1 = jax.random.uniform(k_w1, (2 * K, K), jnp.float32, -bound1, bound1)
    b1 = jax.random.uniform(k_b1, (K,), jnp.float32, -bound1, bound1)
    bound2 = 1.0 / jnp.sqrt(K)
    w2 = jax.random.uniform(k_w2, (K, K), jnp.float32, -bound2, bound2)
    b2 = jax.random.uniform(k_b2, (K,), jnp.float32, -bound2, bound2)

    x = jax.random.normal(k_x, (B, H, W, K), dtype=jnp.float32)

    out = learned_positional_encoder(x, enc, w1, b1, w2, b2)
    out = jax.block_until_ready(out)

    ref = _reference(x, enc, w1, b1, w2, b2)
    assert out.shape == (B, H, W, K)
    assert jnp.allclose(out, ref, atol=2e-5, rtol=2e-5), "mismatch vs reference"

    print("KERNEL_OK")
</pallas_src>

<mosaic_0001>
module attributes {stable_mosaic.version = 11 : i64} {
  func.func @_pe_mlp_kernel(%arg0: i32, %arg1: i32, %arg2: memref<1x128x32xf32, #tpu.memory_space<vmem>>, %arg3: memref<128x32xf32, #tpu.memory_space<vmem>>, %arg4: memref<32x32xf32, #tpu.memory_space<vmem>>, %arg5: memref<32x32xf32, #tpu.memory_space<vmem>>, %arg6: memref<1x32xf32, #tpu.memory_space<vmem>>, %arg7: memref<1x128x32xf32, #tpu.memory_space<vmem>>) attributes {dimension_semantics = [#tpu.dimension_semantics<parallel>, #tpu.dimension_semantics<parallel>], iteration_bounds = array<i64: 1, 2>, scalar_prefetch = 0 : i64, scratch_operands = 0 : i64, tpu.core_type = #tpu.core_type<tc>, window_params = [{transform_indices = @transform_0, window_bounds = array<i64: 1, 128, 32>}, {transform_indices = @transform_1, window_bounds = array<i64: 128, 32>}, {pipeline_mode = #tpu.pipeline_mode<synchronous>, transform_indices = @transform_2, window_bounds = array<i64: 32, 32>}, {pipeline_mode = #tpu.pipeline_mode<synchronous>, transform_indices = @transform_3, window_bounds = array<i64: 32, 32>}, {pipeline_mode = #tpu.pipeline_mode<synchronous>, transform_indices = @transform_4, window_bounds = array<i64: 1, 32>}, {transform_indices = @transform_5, window_bounds = array<i64: 1, 128, 32>}]} {
    %c0 = arith.constant 0 : index
    %c0_0 = arith.constant 0 : index
    %c0_1 = arith.constant 0 : index
    %0 = vector.load %arg2[%c0, %c0_0, %c0_1] : memref<1x128x32xf32, #tpu.memory_space<vmem>>, vector<1x128x32xf32>
    %1 = vector.shape_cast %0 : vector<1x128x32xf32> to vector<128x32xf32>
    %c0_2 = arith.constant 0 : index
    %c0_3 = arith.constant 0 : index
    %2 = vector.load %arg4[%c0_2, %c0_3] : memref<32x32xf32, #tpu.memory_space<vmem>>, vector<32x32xf32>
    %cst = arith.constant dense<0.000000e+00> : vector<128x32xf32>
    %3 = tpu.matmul %1, %2, %cst {dimension_numbers = #tpu.dot_dimension_numbers<[1], [0], [0], [1], [0, 0, 1, 1], [], []>} : vector<128x32xf32>, vector<32x32xf32>, vector<128x32xf32> -> vector<128x32xf32>
    %c0_4 = arith.constant 0 : index
    %c0_5 = arith.constant 0 : index
    %4 = vector.load %arg3[%c0_4, %c0_5] : memref<128x32xf32, #tpu.memory_space<vmem>>, vector<128x32xf32>
    %5 = arith.addf %3, %4 : vector<128x32xf32>
    %cst_6 = arith.constant 0.000000e+00 : f32
    %6 = vector.broadcast %cst_6 : f32 to vector<128x32xf32>
    %7 = arith.maximumf %5, %6 : vector<128x32xf32>
    %c0_7 = arith.constant 0 : index
    %c0_8 = arith.constant 0 : index
    %8 = vector.load %arg5[%c0_7, %c0_8] : memref<32x32xf32, #tpu.memory_space<vmem>>, vector<32x32xf32>
    %cst_9 = arith.constant dense<0.000000e+00> : vector<128x32xf32>
    %9 = tpu.matmul %7, %8, %cst_9 {dimension_numbers = #tpu.dot_dimension_numbers<[1], [0], [0], [1], [0, 0, 1, 1], [], []>} : vector<128x32xf32>, vector<32x32xf32>, vector<128x32xf32> -> vector<128x32xf32>
    %c0_10 = arith.constant 0 : index
    %c0_11 = arith.constant 0 : index
    %10 = vector.load %arg6[%c0_10, %c0_11] : memref<1x32xf32, #tpu.memory_space<vmem>>, vector<1x32xf32>
    %11 = vector.broadcast %10 : vector<1x32xf32> to vector<128x32xf32>
    %12 = arith.addf %9, %11 : vector<128x32xf32>
    %cst_12 = arith.constant 0.000000e+00 : f32
    %13 = vector.broadcast %cst_12 : f32 to vector<128x32xf32>
    %14 = arith.maximumf %12, %13 : vector<128x32xf32>
    %c0_13 = arith.constant 0 : index
    %c0_14 = arith.constant 0 : index
    %c0_15 = arith.constant 0 : index
    %15 = vector.load %arg7[%c0_13, %c0_14, %c0_15] : memref<1x128x32xf32, #tpu.memory_space<vmem>>, vector<1x128x32xf32>
    %16 = vector.shape_cast %15 : vector<1x128x32xf32> to vector<128x32xf32>
    %17 = vector.shape_cast %14 : vector<128x32xf32> to vector<1x128x32xf32>
    tpu.vector_store %arg7[%c0_13, %c0_14, %c0_15], %17 {strides = array<i32>} : memref<1x128x32xf32, #tpu.memory_space<vmem>>, vector<1x128x32xf32>,
    return
  }
  func.func @transform_0(%arg0: i32, %arg1: i32) -> (i32, i32, i32) {
    %c0_i32 = arith.constant 0 : i32
    %c0_i32_0 = arith.constant 0 : i32
    return %arg1, %arg0, %c0_i32 : i32, i32, i32
  }
  func.func @transform_1(%arg0: i32, %arg1: i32) -> (i32, i32) {
    %c0_i32 = arith.constant 0 : i32
    %c0_i32_0 = arith.constant 0 : i32
    return %arg0, %c0_i32 : i32, i32
  }
  func.func @transform_2(%arg0: i32, %arg1: i32) -> (i32, i32) {
    %c0_i32 = arith.constant 0 : i32
    %c0_i32_0 = arith.constant 0 : i32
    %c0_i32_1 = arith.constant 0 : i32
    return %c0_i32, %c0_i32_0 : i32, i32
  }
  func.func @transform_3(%arg0: i32, %arg1: i32) -> (i32, i32) {
    %c0_i32 = arith.constant 0 : i32
    %c0_i32_0 = arith.constant 0 : i32
    %c0_i32_1 = arith.constant 0 : i32
    return %c0_i32, %c0_i32_0 : i32, i32
  }
  func.func @transform_4(%arg0: i32, %arg1: i32) -> (i32, i32) {
    %c0_i32 = arith.constant 0 : i32
    %c0_i32_0 = arith.constant 0 : i32
    %c0_i32_1 = arith.constant 0 : i32
    return %c0_i32, %c0_i32_0 : i32, i32
  }
  func.func @transform_5(%arg0: i32, %arg1: i32) -> (i32, i32, i32) {
    %c0_i32 = arith.constant 0 : i32
    %c0_i32_0 = arith.constant 0 : i32
    return %arg1, %arg0, %c0_i32 : i32, i32, i32
  }
}

</mosaic_0001>

<llo_original>
// kernel: tpu_custom_call.1
$region0: #{tpu_custom_call.1}
  #allocation0 [shape = 'u32[]', space=smem, size = 0x4, offset = 0x4, fixed_abs, tag = 'smem constant byte address 0x4 - core index']
  #allocation1 [shape = 'u32[144,128]{1,0:T(1,128)}', space=vmem, size = 0x12000, scoped, tag = 'internal scratch']
  %s0 = inlined_call_operand.vmem [shape: f32[2,128,32], index: 0, kind: input, shape index: {}]
  %s1 = inlined_call_operand.vmem [shape: f32[128,32], index: 1, kind: input, shape index: {}]
  %s2 = inlined_call_operand.vmem [shape: f32[32,32], index: 2, kind: input, shape index: {}]
  %s3 = inlined_call_operand.vmem [shape: f32[32,32], index: 3, kind: input, shape index: {}]
  %s4 = inlined_call_operand.vmem [shape: f32[1,32], index: 4, kind: input, shape index: {}]
  %s5 = inlined_call_operand.vmem [shape: f32[2,128,32], index: 5, kind: output, shape index: {}]
  %s6 = sld [smem:[#allocation0]]
  $region53: #{tpu_custom_call.1} parent=0
    _
  %s8 = ssub.s32 1, %s6
  %s9 = scalar_select 0, %s8, %s6
  loop: start=0, step=1, limit=4
  $region2: #{tpu_custom_call.1} parent=0 // loop_pre_header
    _
  $region3: #{tpu_custom_call.1} parent=0 // loop_header
    %s11 = sphi 0, %s15
    %p12 = scmp.ge.s32.totalorder %s11, 4
    %s18 = sphi 0, %s30
    %s19 = sphi 0, %s26
    %s20 = sphi 0, %s18
    %s21 = sphi 0, %s19
    %s22 = sphi 0, %s20
    %s23 = sphi 0, %s21
    %s35 = sphi 0, %s37
    %s38 = sphi 0, %s35
    %s39 = sphi 0, %s38
    %s55 = sphi 0, %s39
    %s61 = sphi 0, %s63
    %s64 = sphi 0, %s61
    %s65 = sphi 0, %s64
    %s81 = sphi 0, %s65
    %s85 = sphi 0, %s85
    %s87 = sphi 0, %s85
    %s88 = sphi 0, %s87
    %s102 = sphi 0, %s88
    %s106 = sphi 0, %s106
    %s108 = sphi 0, %s106
    %s109 = sphi 0, %s108
    %s123 = sphi 0, %s109
    %s127 = sphi 0, %s127
    %s129 = sphi 0, %s127
    %s130 = sphi 0, %s129
    %s144 = sphi 0, %s130
    %s152 = sphi 0, %s154
    %s155 = sphi 0, %s152
    %s156 = sphi 0, %s155
    %s172 = sphi 0, %s156
  $region4: #{tpu_custom_call.1} parent=0 // loop_header_branch
    %14 = sbr.rel (%p12) target = $region8
  $region5: #{tpu_custom_call.1} parent=0 // loop_body
    %s16 = ssub.s32 %s11, 1
    %s17 = ssub.s32 %s11, 2
    %s24 = sadd.s32 1, %s19
    %p25 = scmp.ge.s32.totalorder %s24, 2
    %s26 = scalar_select %p25, 0, %s24
    %s27 = sadd.s32 1, %s18
    %s28 = scalar_select %p25, %s27, %s18
    %p29 = scmp.ge.s32.totalorder %s28, 1
    %s30 = scalar_select %p29, 0, %s28
    %s31 = ssub.s32 %s19, %s26
    %s32 = ssub.s32 %s18, %s30
    %s33 = sor.u32 %s31, %s32
    %p34 = scmp.eq.s32.totalorder %s33, 0
    %s36 = sadd.s32 %s35, 1
    %s37 = scalar_select %p34, %s35, %s36
    %p40 = pneg %p34
    %p41 = scmp.eq.s32.totalorder %s11, 1
    %p42 = por %p40, %p41
    %p43 = scmp.ne.s32.totalorder %s35, %s38
    %p44 = scmp.eq.s32.totalorder %s11, 0
    %p45 = por %p43, %p44
    %p46 = scmp.ne.s32.totalorder %s35, %s38
    %p47 = scmp.eq.s32.totalorder %s16, 1
    %p48 = por %p46, %p47
    %p49 = scmp.ne.s32.totalorder %s38, %s39
    %p50 = scmp.eq.s32.totalorder %s16, 0
    %p51 = por %p49, %p50
    %p52 = scmp.ne.s32.totalorder %s38, %s39
    %p53 = scmp.eq.s32.totalorder %s17, 1
    %p54 = por %p52, %p53
    %p56 = scmp.ne.s32.totalorder %s39, %s55
    %p57 = scmp.eq.s32.totalorder %s17, 0
    %p58 = por %p56, %p57
    %s59 = ssub.s32 %s18, %s30
    %p60 = scmp.eq.s32.totalorder %s59, 0
    %s62 = sadd.s32 %s61, 1
    %s63 = scalar_select %p60, %s61, %s62
    %p66 = pneg %p60
    %p67 = scmp.eq.s32.totalorder %s11, 1
    %p68 = por %p66, %p67
    %p69 = scmp.ne.s32.totalorder %s61, %s64
    %p70 = scmp.eq.s32.totalorder %s11, 0
    %p71 = por %p69, %p70
    %p72 = scmp.ne.s32.totalorder %s61, %s64
    %p73 = scmp.eq.s32.totalorder %s16, 1
    %p74 = por %p72, %p73
    %p75 = scmp.ne.s32.totalorder %s64, %s65
    %p76 = scmp.eq.s32.totalorder %s16, 0
    %p77 = por %p75, %p76
    %p78 = scmp.ne.s32.totalorder %s64, %s65
    %p79 = scmp.eq.s32.totalorder %s17, 1
    %p80 = por %p78, %p79
    %p82 = scmp.ne.s32.totalorder %s65, %s81
    %p83 = scmp.eq.s32.totalorder %s17, 0
    %p84 = por %p82, %p83
    %s86 = sadd.s32 %s85, 1
    %p89 = scmp.eq.s32.totalorder %s11, 1
    %p90 = scmp.ne.s32.totalorder %s85, %s87
    %p91 = scmp.eq.s32.totalorder %s11, 0
    %p92 = por %p90, %p91
    %p93 = scmp.ne.s32.totalorder %s85, %s87
    %p94 = scmp.eq.s32.totalorder %s16, 1
    %p95 = por %p93, %p94
    %p96 = scmp.ne.s32.totalorder %s87, %s88
    %p97 = scmp.eq.s32.totalorder %s16, 0
    %p98 = por %p96, %p97
    %p99 = scmp.ne.s32.totalorder %s87, %s88
    %p100 = scmp.eq.s32.totalorder %s17, 1
    %p101 = por %p99, %p100
    %p103 = scmp.ne.s32.totalorder %s88, %s102
    %p104 = scmp.eq.s32.totalorder %s17, 0
    %p105 = por %p103, %p104
    %s107 = sadd.s32 %s106, 1
    %p110 = scmp.eq.s32.totalorder %s11, 1
    %p111 = scmp.ne.s32.totalorder %s106, %s108
    %p112 = scmp.eq.s32.totalorder %s11, 0
    %p113 = por %p111, %p112
    %p114 = scmp.ne.s32.totalorder %s106, %s108
    %p115 = scmp.eq.s32.totalorder %s16, 1
    %p116 = por %p114, %p115
    %p117 = scmp.ne.s32.totalorder %s108, %s109
    %p118 = scmp.eq.s32.totalorder %s16, 0
    %p119 = por %p117, %p118
    %p120 = scmp.ne.s32.totalorder %s108, %s109
    %p121 = scmp.eq.s32.totalorder %s17, 1
    %p122 = por %p120, %p121
    %p124 = scmp.ne.s32.totalorder %s109, %s123
    %p125 = scmp.eq.s32.totalorder %s17, 0
    %p126 = por %p124, %p125
    %s128 = sadd.s32 %s127, 1
    %p131 = scmp.eq.s32.totalorder %s11, 1
    %p132 = scmp.ne.s32.totalorder %s127, %s129
    %p133 = scmp.eq.s32.totalorder %s11, 0
    %p134 = por %p132, %p133
    %p135 = scmp.ne.s32.totalorder %s127, %s129
    %p136 = scmp.eq.s32.totalorder %s16, 1
    %p137 = por %p135, %p136
    %p138 = scmp.ne.s32.totalorder %s129, %s130
    %p139 = scmp.eq.s32.totalorder %s16, 0
    %p140 = por %p138, %p139
    %p141 = scmp.ne.s32.totalorder %s129, %s130
    %p142 = scmp.eq.s32.totalorder %s17, 1
    %p143 = por %p141, %p142
    %p145 = scmp.ne.s32.totalorder %s130, %s144
    %p146 = scmp.eq.s32.totalorder %s17, 0
    %p147 = por %p145, %p146
    %s148 = ssub.s32 %s19, %s26
    %s149 = ssub.s32 %s18, %s30
    %s150 = sor.u32 %s148, %s149
    %p151 = scmp.eq.s32.totalorder %s150, 0
    %s153 = sadd.s32 %s152, 1
    %s154 = scalar_select %p151, %s152, %s153
    %p157 = pneg %p151
    %p158 = scmp.eq.s32.totalorder %s11, 1
    %p159 = por %p157, %p158
    %p160 = scmp.ne.s32.totalorder %s152, %s155
    %p161 = scmp.eq.s32.totalorder %s11, 0
    %p162 = por %p160, %p161
    %p163 = scmp.ne.s32.totalorder %s152, %s155
    %p164 = scmp.eq.s32.totalorder %s16, 1
    %p165 = por %p163, %p164
    %p166 = scmp.ne.s32.totalorder %s155, %s156
    %p167 = scmp.eq.s32.totalorder %s16, 0
    %p168 = por %p166, %p167
    %p169 = scmp.ne.s32.totalorder %s155, %s156
    %p170 = scmp.eq.s32.totalorder %s17, 1
    %p171 = por %p169, %p170
    %p173 = scmp.ne.s32.totalorder %s156, %s172
    %p174 = scmp.eq.s32.totalorder %s17, 0
    %p175 = por %p173, %p174
    %p176 = scmp.le.s32.totalorder 1, %s11
    %p177 = scmp.lt.s32.totalorder %s11, 3
    %p178 = pnand %p176, %p177
    %p179 = pneg %p178
    // Predicated region
    $region9: #{tpu_custom_call.1} parent=5 // pred_check
      _
    $region10: #{tpu_custom_call.1} parent=5 // pred_check_branch
      %181 = sbr.rel (%p178) target = $region12
    $region11: #{tpu_custom_call.1} parent=5 // pred_region
      %s182 = ssub.s32 %s11, 1
      // Predicated region
      $region13: #{tpu_custom_call.1} parent=11 // pred_check
        %p183 = pneg %p77
      $region14: #{tpu_custom_call.1} parent=11 // pred_check_branch
        %185 = sbr.rel (%p183) target = $region16
      $region15: #{tpu_custom_call.1} parent=11 // pred_region
        %s186 = smul.u32 16, %s20
        %p187 = scmp.lt.s32.totalorder %s186, 15
        %s188 = scalar_select %p187, %s186, 15
        %s189 = smul.addr %s188, 8
        %s190 = scalar_lea.vmem %s1, %s189
        %s191 = smul.u32 16, %s20
      $region16: #{tpu_custom_call.1} parent=11 // pred_fallthru
        _
      // Predicated region
      $region17: #{tpu_custom_call.1} parent=11 // pred_check
        %p192 = pneg %p98
      $region18: #{tpu_custom_call.1} parent=11 // pred_check_branch
        %194 = sbr.rel (%p192) target = $region20
      $region19: #{tpu_custom_call.1} parent=11 // pred_region
        _
      $region20: #{tpu_custom_call.1} parent=11 // pred_fallthru
        _
      // Predicated region
      $region21: #{tpu_custom_call.1} parent=11 // pred_check
        %p195 = pneg %p119
      $region22: #{tpu_custom_call.1} parent=11 // pred_check_branch
        %197 = sbr.rel (%p195) target = $region24
      $region23: #{tpu_custom_call.1} parent=11 // pred_region
        _
      $region24: #{tpu_custom_call.1} parent=11 // pred_fallthru
        _
      // Predicated region
      $region25: #{tpu_custom_call.1} parent=11 // pred_check
        %p198 = pneg %p140
      $region26: #{tpu_custom_call.1} parent=11 // pred_check_branch
        %200 = sbr.rel (%p198) target = $region28
      $region27: #{tpu_custom_call.1} parent=11 // pred_region
        _
      $region28: #{tpu_custom_call.1} parent=11 // pred_fallthru
        _
    $region12: #{tpu_custom_call.1} parent=5 // pred_fallthru
      _
    %p201 = scmp.lt.s32.totalorder %s11, 2
    // Predicated region
    $region29: #{tpu_custom_call.1} parent=5 // pred_check
      %p202 = pneg %p201
    $region30: #{tpu_custom_call.1} parent=5 // pred_check_branch
      %204 = sbr.rel (%p202) target = $region32
    $region31: #{tpu_custom_call.1} parent=5 // pred_region
      // Predicated region
      $region33: #{tpu_custom_call.1} parent=31 // pred_check
        %p205 = pneg %p45
      $region34: #{tpu_custom_call.1} parent=31 // pred_check_branch
        %207 = sbr.rel (%p205) target = $region36
      $region35: #{tpu_custom_call.1} parent=31 // pred_region
        %s208 = smul.u32 16, %s18
        %p209 = scmp.lt.s32.totalorder %s19, 1
        %s210 = scalar_select %p209, %s19, 1
        %p211 = scmp.lt.s32.totalorder %s208, 15
        %s212 = scalar_select %p211, %s208, 15
        %s213 = smul.addr %s210, 16
        %s214 = sadd.s32 %s212, %s213
        %s215 = smul.addr %s214, 8
        %s216 = scalar_lea.vmem %s0, %s215
        %s217 = smul.u32 16, %s18
      $region36: #{tpu_custom_call.1} parent=31 // pred_fallthru
        _
    $region32: #{tpu_custom_call.1} parent=5 // pred_fallthru
      _
    %p218 = scmp.le.s32.totalorder 1, %s11
    %p219 = scmp.lt.s32.totalorder %s11, 3
    %p220 = pnand %p218, %p219
    %p221 = pneg %p220
    // Predicated region
    $region37: #{tpu_custom_call.1} parent=5 // pred_check
      _
    $region38: #{tpu_custom_call.1} parent=5 // pred_check_branch
      %223 = sbr.rel (%p220) target = $region40
    $region39: #{tpu_custom_call.1} parent=5 // pred_region
      %s224 = ssub.s32 %s11, 1
      %s225 = smul.u32 16, %s20
      %p226 = scmp.lt.s32.totalorder %s21, 1
      %s227 = scalar_select %p226, %s21, 1
      %p228 = scmp.lt.s32.totalorder %s225, 15
      %s229 = scalar_select %p228, %s225, 15
      %s230 = smul.addr %s227, 16
      %s231 = sadd.s32 %s229, %s230
      %s232 = smul.addr %s231, 8
      %s233 = scalar_lea.vmem %s0, %s232
      %p234 = pneg %p51
      %p235 = pneg %p48
      %s236 = smul.u32 16, %s20
      %p237 = scmp.lt.s32.totalorder %s236, 15
      %s238 = scalar_select %p237, %s236, 15
      %s239 = smul.addr %s238, 8
      %s240 = scalar_lea.vmem %s1, %s239
      %p241 = pneg %p77
      %p242 = pneg %p74
      %p243 = pneg %p98
      %p244 = pneg %p95
      %p245 = pneg %p119
      %p246 = pneg %p116
      %p247 = pneg %p140
      %p248 = pneg %p137
      %p249 = pneg %p168
      %p250 = pneg %p165
      %s251 = smul.u32 16, %s20
      %p252 = scmp.lt.s32.totalorder %s21, 1
      %s253 = scalar_select %p252, %s21, 1
      %p254 = scmp.lt.s32.totalorder %s251, 15
      %s255 = scalar_select %p254, %s251, 15
      %s256 = smul.addr %s253, 16
      %s257 = sadd.s32 %s255, %s256
      %s258 = smul.addr %s257, 8
      %s259 = scalar_lea.vmem %s5, %s258
      %s260 = smul.u32 16, %s20
      %p261 = scmp.lt.s32.totalorder %s21, 1
      %s262 = scalar_select %p261, %s21, 1
      %p263 = scmp.lt.s32.totalorder %s260, 15
      %s264 = scalar_select %p263, %s260, 15
      %s265 = smul.addr %s262, 16
      %s266 = sadd.s32 %s264, %s265
      %s267 = smul.addr %s266, 8
      %s268 = scalar_lea.vmem %s0, %s267
      %s269 = smul.u32 16, %s20
      %s270 = smul.u32 16, %s20
      %p271 = scmp.lt.s32.totalorder %s270, 15
      %s272 = scalar_select %p271, %s270, 15
      %s273 = smul.addr %s272, 8
      %s274 = scalar_lea.vmem %s1, %s273
      %s275 = smul.u32 16, %s20
      %s276 = smul.u32 16, %s20
      %p277 = scmp.lt.s32.totalorder %s21, 1
      %s278 = scalar_select %p277, %s21, 1
      %p279 = scmp.lt.s32.totalorder %s276, 15
      %s280 = scalar_select %p279, %s276, 15
      %s281 = smul.addr %s278, 16
      %s282 = sadd.s32 %s280, %s281
      %s283 = smul.addr %s282, 8
      %s284 = scalar_lea.vmem %s5, %s283
      %s285 = smul.u32 16, %s20
      %v286 = vld [vmem:[%s268] sm:$0xff]
      %v287 = vld [vmem:[%s268 + $0x8] sm:$0xff]
      %v288 = vld [vmem:[%s268 + $0x10] sm:$0xff]
      %v289 = vld [vmem:[%s268 + $0x18] sm:$0xff]
      %v290 = vld [vmem:[%s268 + $0x20] sm:$0xff]
      %v291 = vld [vmem:[%s268 + $0x28] sm:$0xff]
      %v292 = vld [vmem:[%s268 + $0x30] sm:$0xff]
      %v293 = vld [vmem:[%s268 + $0x38] sm:$0xff]
      %v294 = vld [vmem:[%s268 + $0x40] sm:$0xff]
      %v295 = vld [vmem:[%s268 + $0x48] sm:$0xff]
      %v296 = vld [vmem:[%s268 + $0x50] sm:$0xff]
      %v297 = vld [vmem:[%s268 + $0x58] sm:$0xff]
      %v298 = vld [vmem:[%s268 + $0x60] sm:$0xff]
      %v299 = vld [vmem:[%s268 + $0x68] sm:$0xff]
      %v300 = vld [vmem:[%s268 + $0x70] sm:$0xff]
      %v301 = vld [vmem:[%s268 + $0x78] sm:$0xff]
      %v302 = vld [vmem:[%s2] sm:$0xff]
      %v303 = vld [vmem:[%s2 + $0x8] sm:$0xff]
      %v304 = vld [vmem:[%s2 + $0x10] sm:$0xff]
      %v305 = vld [vmem:[%s2 + $0x18] sm:$0xff]
      %v306 = vld [vmem:[%s274] sm:$0xff]
      %v307 = vld [vmem:[%s274 + $0x8] sm:$0xff]
      %v308 = vld [vmem:[%s274 + $0x10] sm:$0xff]
      %v309 = vld [vmem:[%s274 + $0x18] sm:$0xff]
      %v310 = vld [vmem:[%s274 + $0x20] sm:$0xff]
      %v311 = vld [vmem:[%s274 + $0x28] sm:$0xff]
      %v312 = vld [vmem:[%s274 + $0x30] sm:$0xff]
      %v313 = vld [vmem:[%s274 + $0x38] sm:$0xff]
      %v314 = vld [vmem:[%s274 + $0x40] sm:$0xff]
      %v315 = vld [vmem:[%s274 + $0x48] sm:$0xff]
      %v316 = vld [vmem:[%s274 + $0x50] sm:$0xff]
      %v317 = vld [vmem:[%s274 + $0x58] sm:$0xff]
      %v318 = vld [vmem:[%s274 + $0x60] sm:$0xff]
      %v319 = vld [vmem:[%s274 + $0x68] sm:$0xff]
      %v320 = vld [vmem:[%s274 + $0x70] sm:$0xff]
      %v321 = vld [vmem:[%s274 + $0x78] sm:$0xff]
      %vm322 = vcmask 261120
      %v324 = vsel %vm322, %v286, 0
      %v327 = vsel %vm322, %v287, 0
      %v330 = vsel %vm322, %v288, 0
      %v333 = vsel %vm322, %v289, 0
      %v336 = vsel %vm322, %v290, 0
      %v339 = vsel %vm322, %v291, 0
      %v342 = vsel %vm322, %v292, 0
      %v345 = vsel %vm322, %v293, 0
      %v348 = vsel %vm322, %v294, 0
      %v351 = vsel %vm322, %v295, 0
      %v354 = vsel %vm322, %v296, 0
      %v357 = vsel %vm322, %v297, 0
      %v360 = vsel %vm322, %v298, 0
      %v363 = vsel %vm322, %v299, 0
      %v366 = vsel %vm322, %v300, 0
      %v369 = vsel %vm322, %v301, 0
      %371 = vmatprep.subr.mxu0 0.0
      %372 = vmatpush1.msra.mxu0 %v302
      %373 = vmatprep.subr.mxu0 0.0
      %374 = vmatpush1.msra.mxu0 %v303
      %375 = vmatprep.subr.mxu0 0.0
      %376 = vmatpush1.msra.mxu0 %v304
      %377 = vmatprep.subr.mxu0 0.0
      %378 = vmatpush1.msra.mxu0 %v305
      %379 = vmatprep.subr.mxu0 0.0
      %380 = vmatpush1.msra.mxu0 0.0
      %381 = vmatprep.subr.mxu0 0.0
      %382 = vmatpush1.msra.mxu0 0.0
      %383 = vmatprep.subr.mxu0 0.0
      %384 = vmatpush1.msra.mxu0 0.0
      %385 = vmatprep.subr.mxu0 0.0
      %386 = vmatpush1.msra.mxu0 0.0
      %387 = vmatprep.subr.mxu0 0.0
      %388 = vmatpush1.msra.mxu0 0.0
      %389 = vmatprep.subr.mxu0 0.0
      %390 = vmatpush1.msra.mxu0 0.0
      %391 = vmatprep.subr.mxu0 0.0
      %392 = vmatpush1.msra.mxu0 0.0
      %393 = vmatprep.subr.mxu0 0.0
      %394 = vmatpush1.msra.mxu0 0.0
      %395 = vmatprep.subr.mxu0 0.0
      %396 = vmatpush1.msra.mxu0 0.0
      %397 = vmatprep.subr.mxu0 0.0
      %398 = vmatpush1.msra.mxu0 0.0
      %399 = vmatprep.subr.mxu0 0.0
      %400 = vmatpush1.msra.mxu0 0.0
      %401 = vmatprep.subr.mxu0 0.0
      %402 = vmatpush1.msra.mxu0 0.0
      %403 = vmatprep.subr.mxu0 0.0
      %404 = vmatpush1.msra.mxu0 0.0
      %405 = vmatprep.subr.mxu0 0.0
      %406 = vmatpush1.msra.mxu0 0.0
      %407 = vmatprep.subr.mxu0 0.0
      %408 = vmatpush1.msra.mxu0 0.0
      %409 = vmatprep.subr.mxu0 0.0
      %410 = vmatpush1.msra.mxu0 0.0
      %411 = vmatprep.subr.mxu0 0.0
      %412 = vmatpush1.msra.mxu0 0.0
      %413 = vmatprep.subr.mxu0 0.0
      %414 = vmatpush1.msra.mxu0 0.0
      %415 = vmatprep.subr.mxu0 0.0
      %416 = vmatpush1.msra.mxu0 0.0
      %417 = vmatprep.subr.mxu0 0.0
      %418 = vmatpush1.msra.mxu0 0.0
      %419 = vmatprep.subr.mxu0 0.0
      %420 = vmatpush1.msra.mxu0 0.0
      %421 = vmatprep.subr.mxu0 0.0
      %422 = vmatpush1.msra.mxu0 0.0
      %423 = vmatprep.subr.mxu0 0.0
      %424 = vmatpush1.msra.mxu0 0.0
      %425 = vmatprep.subr.mxu0 0.0
      %426 = vmatpush1.msra.mxu0 0.0
      %427 = vmatprep.subr.mxu0 0.0
      %428 = vmatpush1.msra.mxu0 0.0
      %429 = vmatprep.subr.mxu0 0.0
      %430 = vmatpush1.msra.mxu0 0.0
      %431 = vmatprep.subr.mxu0 0.0
      %432 = vmatpush1.msra.mxu0 0.0
      %433 = vmatprep.subr.mxu0 0.0
      %434 = vmatpush1.msra.mxu0 0.0
      %435 = vmatprep.mubr.f32.mxu0 0.0
      %436 = vmatmul.mubr.f32.gmra.mrb[0].mxu0 %v324
      %v437 = vpop.f32.mrb[0].mxu0
      %v438 = vadd.f32 %v306, %v437
      %v439 = vpop.f32.mrb[0].mxu0
      %440 = vmatprep.mubr.f32.mxu0 0.0
      %441 = vmatmul.mubr.f32.gmra.mrb[0].mxu0 %v327
      %v442 = vpop.f32.mrb[0].mxu0
      %v443 = vadd.f32 %v307, %v442
      %v444 = vpop.f32.mrb[0].mxu0
      %445 = vmatprep.mubr.f32.mxu0 0.0
      %446 = vmatmul.mubr.f32.gmra.mrb[0].mxu0 %v330
      %v447 = vpop.f32.mrb[0].mxu0
      %v448 = vadd.f32 %v308, %v447
      %v449 = vpop.f32.mrb[0].mxu0
      %450 = vmatprep.mubr.f32.mxu0 0.0
      %451 = vmatmul.mubr.f32.gmra.mrb[0].mxu0 %v333
      %v452 = vpop.f32.mrb[0].mxu0
      %v453 = vadd.f32 %v309, %v452
      %v454 = vpop.f32.mrb[0].mxu0
      %455 = vmatprep.mubr.f32.mxu0 0.0
      %456 = vmatmul.mubr.f32.gmra.mrb[0].mxu0 %v336
      %v457 = vpop.f32.mrb[0].mxu0
      %v458 = vadd.f32 %v310, %v457
      %v459 = vpop.f32.mrb[0].mxu0
      %460 = vmatprep.mubr.f32.mxu0 0.0
      %461 = vmatmul.mubr.f32.gmra.mrb[0].mxu0 %v339
      %v462 = vpop.f32.mrb[0].mxu0
      %v463 = vadd.f32 %v311, %v462
      %v464 = vpop.f32.mrb[0].mxu0
      %465 = vmatprep.mubr.f32.mxu0 0.0
      %466 = vmatmul.mubr.f32.gmra.mrb[0].mxu0 %v342
      %v467 = vpop.f32.mrb[0].mxu0
      %v468 = vadd.f32 %v312, %v467
      %v469 = vpop.f32.mrb[0].mxu0
      %470 = vmatprep.mubr.f32.mxu0 0.0
      %471 = vmatmul.mubr.f32.gmra.mrb[0].mxu0 %v345
      %v472 = vpop.f32.mrb[0].mxu0
      %v473 = vadd.f32 %v313, %v472
      %v474 = vpop.f32.mrb[0].mxu0
      %475 = vmatprep.mubr.f32.mxu0 0.0
      %476 = vmatmul.mubr.f32.gmra.mrb[0].mxu0 %v348
      %v477 = vpop.f32.mrb[0].mxu0
      %v478 = vadd.f32 %v314, %v477
      %v479 = vpop.f32.mrb[0].mxu0
      %480 = vmatprep.mubr.f32.mxu0 0.0
      %481 = vmatmul.mubr.f32.gmra.mrb[0].mxu0 %v351
      %v482 = vpop.f32.mrb[0].mxu0
      %v483 = vadd.f32 %v315, %v482
      %v484 = vpop.f32.mrb[0].mxu0
      %485 = vmatprep.mubr.f32.mxu0 0.0
      %486 = vmatmul.mubr.f32.gmra.mrb[0].mxu0 %v354
      %v487 = vpop.f32.mrb[0].mxu0
      %v488 = vadd.f32 %v316, %v487
      %v489 = vpop.f32.mrb[0].mxu0
      %490 = vmatprep.mubr.f32.mxu0 0.0
      %491 = vmatmul.mubr.f32.gmra.mrb[0].mxu0 %v357
      %v492 = vpop.f32.mrb[0].mxu0
      %v493 = vadd.f32 %v317, %v492
      %v494 = vpop.f32.mrb[0].mxu0
      %495 = vmatprep.mubr.f32.mxu0 0.0
      %496 = vmatmul.mubr.f32.gmra.mrb[0].mxu0 %v360
      %v497 = vpop.f32.mrb[0].mxu0
      %v498 = vadd.f32 %v318, %v497
      %v499 = vpop.f32.mrb[0].mxu0
      %500 = vmatprep.mubr.f32.mxu0 0.0
      %501 = vmatmul.mubr.f32.gmra.mrb[0].mxu0 %v363
      %v502 = vpop.f32.mrb[0].mxu0
      %v503 = vadd.f32 %v319, %v502
      %v504 = vpop.f32.mrb[0].mxu0
      %505 = vmatprep.mubr.f32.mxu0 0.0
      %506 = vmatmul.mubr.f32.gmra.mrb[0].mxu0 %v366
      %v507 = vpop.f32.mrb[0].mxu0
      %v508 = vadd.f32 %v320, %v507
      %v509 = vpop.f32.mrb[0].mxu0
      %510 = vmatprep.mubr.f32.mxu0 0.0
      %511 = vmatmul.mubr.f32.gmra.mrb[0].mxu0 %v369
      %v512 = vpop.f32.mrb[0].mxu0
      %v513 = vadd.f32 %v321, %v512
      %v514 = vpop.f32.mrb[0].mxu0
      %515 = vdwg.mxu0
      %v516 = vmax.f32 %v438, 0.0
      %v517 = vmax.f32 %v443, 0.0
      %v518 = vmax.f32 %v448, 0.0
      %v519 = vmax.f32 %v453, 0.0
      %v520 = vmax.f32 %v458, 0.0
      %v521 = vmax.f32 %v463, 0.0
      %v522 = vmax.f32 %v468, 0.0
      %v523 = vmax.f32 %v473, 0.0
      %v524 = vmax.f32 %v478, 0.0
      %v525 = vmax.f32 %v483, 0.0
      %v526 = vmax.f32 %v488, 0.0
      %v527 = vmax.f32 %v493, 0.0
      %v528 = vmax.f32 %v498, 0.0
      %v529 = vmax.f32 %v503, 0.0
      %v530 = vmax.f32 %v508, 0.0
      %v531 = vmax.f32 %v513, 0.0
      %v532 = vld [vmem:[%s3] sm:$0xff]
      %v533 = vld [vmem:[%s3 + $0x8] sm:$0xff]
      %v534 = vld [vmem:[%s3 + $0x10] sm:$0xff]
      %v535 = vld [vmem:[%s3 + $0x18] sm:$0xff]
      %v536 = vld [vmem:[%s4] sm:$0x1]
      %v538 = vlaneseq
      %v539 = vshrl.u32 %v538, 7
      %v540 = vsub.s32 0, %v539
      %v541 = vrot.slane %v536, %v540
      %v544 = vsel %vm322, %v516, 0
      %v547 = vsel %vm322, %v517, 0
      %v550 = vsel %vm322, %v518, 0
      %v553 = vsel %vm322, %v519, 0
      %v556 = vsel %vm322, %v520, 0
      %v559 = vsel %vm322, %v521, 0
      %v562 = vsel %vm322, %v522, 0
      %v565 = vsel %vm322, %v523, 0
      %v568 = vsel %vm322, %v524, 0
      %v571 = vsel %vm322, %v525, 0
      %v574 = vsel %vm322, %v526, 0
      %v577 = vsel %vm322, %v527, 0
      %v580 = vsel %vm322, %v528, 0
      %v583 = vsel %vm322, %v529, 0
      %v586 = vsel %vm322, %v530, 0
      %v589 = vsel %vm322, %v531, 0
      %591 = vmatprep.subr.mxu0 0.0
      %592 = vmatpush1.msra.mxu0 %v532
      %593 = vmatprep.subr.mxu0 0.0
      %594 = vmatpush1.msra.mxu0 %v533
      %595 = vmatprep.subr.mxu0 0.0
      %596 = vmatpush1.msra.mxu0 %v534
      %597 = vmatprep.subr.mxu0 0.0
      %598 = vmatpush1.msra.mxu0 %v535
      %599 = vmatprep.subr.mxu0 0.0
      %600 = vmatpush1.msra.mxu0 0.0
      %601 = vmatprep.subr.mxu0 0.0
      %602 = vmatpush1.msra.mxu0 0.0
      %603 = vmatprep.subr.mxu0 0.0
      %604 = vmatpush1.msra.mxu0 0.0
      %605 = vmatprep.subr.mxu0 0.0
      %606 = vmatpush1.msra.mxu0 0.0
      %607 = vmatprep.subr.mxu0 0.0
      %608 = vmatpush1.msra.mxu0 0.0
      %609 = vmatprep.subr.mxu0 0.0
      %610 = vmatpush1.msra.mxu0 0.0
      %611 = vmatprep.subr.mxu0 0.0
      %612 = vmatpush1.msra.mxu0 0.0
      %613 = vmatprep.subr.mxu0 0.0
      %614 = vmatpush1.msra.mxu0 0.0
      %615 = vmatprep.subr.mxu0 0.0
      %616 = vmatpush1.msra.mxu0 0.0
      %617 = vmatprep.subr.mxu0 0.0
      %618 = vmatpush1.msra.mxu0 0.0
      %619 = vmatprep.subr.mxu0 0.0
      %620 = vmatpush1.msra.mxu0 0.0
      %621 = vmatprep.subr.mxu0 0.0
      %622 = vmatpush1.msra.mxu0 0.0
      %623 = vmatprep.subr.mxu0 0.0
      %624 = vmatpush1.msra.mxu0 0.0
      %625 = vmatprep.subr.mxu0 0.0
      %626 = vmatpush1.msra.mxu0 0.0
      %627 = vmatprep.subr.mxu0 0.0
      %628 = vmatpush1.msra.mxu0 0.0
      %629 = vmatprep.subr.mxu0 0.0
      %630 = vmatpush1.msra.mxu0 0.0
      %631 = vmatprep.subr.mxu0 0.0
      %632 = vmatpush1.msra.mxu0 0.0
      %633 = vmatprep.subr.mxu0 0.0
      %634 = vmatpush1.msra.mxu0 0.0
      %635 = vmatprep.subr.mxu0 0.0
      %636 = vmatpush1.msra.mxu0 0.0
      %637 = vmatprep.subr.mxu0 0.0
      %638 = vmatpush1.msra.mxu0 0.0
      %639 = vmatprep.subr.mxu0 0.0
      %640 = vmatpush1.msra.mxu0 0.0
      %641 = vmatprep.subr.mxu0 0.0
      %642 = vmatpush1.msra.mxu0 0.0
      %643 = vmatprep.subr.mxu0 0.0
      %644 = vmatpush1.msra.mxu0 0.0
      %645 = vmatprep.subr.mxu0 0.0
      %646 = vmatpush1.msra.mxu0 0.0
      %647 = vmatprep.subr.mxu0 0.0
      %648 = vmatpush1.msra.mxu0 0.0
      %649 = vmatprep.subr.mxu0 0.0
      %650 = vmatpush1.msra.mxu0 0.0
      %651 = vmatprep.subr.mxu0 0.0
      %652 = vmatpush1.msra.mxu0 0.0
      %653 = vmatprep.subr.mxu0 0.0
      %654 = vmatpush1.msra.mxu0 0.0
      %655 = vmatprep.mubr.f32.mxu0 0.0
      %656 = vmatmul.mubr.f32.gmra.mrb[0].mxu0 %v544
      %v657 = vpop.f32.mrb[0].mxu0
      %v658 = vadd.f32 %v541, %v657
      %v659 = vpop.f32.mrb[0].mxu0
      %660 = vmatprep.mubr.f32.mxu0 0.0
      %661 = vmatmul.mubr.f32.gmra.mrb[0].mxu0 %v547
      %v662 = vpop.f32.mrb[0].mxu0
      %v663 = vadd.f32 %v541, %v662
      %v664 = vpop.f32.mrb[0].mxu0
      %665 = vmatprep.mubr.f32.mxu0 0.0
      %666 = vmatmul.mubr.f32.gmra.mrb[0].mxu0 %v550
      %v667 = vpop.f32.mrb[0].mxu0
      %v668 = vadd.f32 %v541, %v667
      %v669 = vpop.f32.mrb[0].mxu0
      %670 = vmatprep.mubr.f32.mxu0 0.0
      %671 = vmatmul.mubr.f32.gmra.mrb[0].mxu0 %v553
      %v672 = vpop.f32.mrb[0].mxu0
      %v673 = vadd.f32 %v541, %v672
      %v674 = vpop.f32.mrb[0].mxu0
      %675 = vmatprep.mubr.f32.mxu0 0.0
      %676 = vmatmul.mubr.f32.gmra.mrb[0].mxu0 %v556
      %v677 = vpop.f32.mrb[0].mxu0
      %v678 = vadd.f32 %v541, %v677
      %v679 = vpop.f32.mrb[0].mxu0
      %680 = vmatprep.mubr.f32.mxu0 0.0
      %681 = vmatmul.mubr.f32.gmra.mrb[0].mxu0 %v559
      %v682 = vpop.f32.mrb[0].mxu0
      %v683 = vadd.f32 %v541, %v682
      %v684 = vpop.f32.mrb[0].mxu0
      %685 = vmatprep.mubr.f32.mxu0 0.0
      %686 = vmatmul.mubr.f32.gmra.mrb[0].mxu0 %v562
      %v687 = vpop.f32.mrb[0].mxu0
      %v688 = vadd.f32 %v541, %v687
      %v689 = vpop.f32.mrb[0].mxu0
      %690 = vmatprep.mubr.f32.mxu0 0.0
      %691 = vmatmul.mubr.f32.gmra.mrb[0].mxu0 %v565
      %v692 = vpop.f32.mrb[0].mxu0
      %v693 = vadd.f32 %v541, %v692
      %v694 = vpop.f32.mrb[0].mxu0
      %695 = vmatprep.mubr.f32.mxu0 0.0
      %696 = vmatmul.mubr.f32.gmra.mrb[0].mxu0 %v568
      %v697 = vpop.f32.mrb[0].mxu0
      %v698 = vadd.f32 %v541, %v697
      %v699 = vpop.f32.mrb[0].mxu0
      %700 = vmatprep.mubr.f32.mxu0 0.0
      %701 = vmatmul.mubr.f32.gmra.mrb[0].mxu0 %v571
      %v702 = vpop.f32.mrb[0].mxu0
      %v703 = vadd.f32 %v541, %v702
      %v704 = vpop.f32.mrb[0].mxu0
      %705 = vmatprep.mubr.f32.mxu0 0.0
      %706 = vmatmul.mubr.f32.gmra.mrb[0].mxu0 %v574
      %v707 = vpop.f32.mrb[0].mxu0
      %v708 = vadd.f32 %v541, %v707
      %v709 = vpop.f32.mrb[0].mxu0
      %710 = vmatprep.mubr.f32.mxu0 0.0
      %711 = vmatmul.mubr.f32.gmra.mrb[0].mxu0 %v577
      %v712 = vpop.f32.mrb[0].mxu0
      %v713 = vadd.f32 %v541, %v712
      %v714 = vpop.f32.mrb[0].mxu0
      %715 = vmatprep.mubr.f32.mxu0 0.0
      %716 = vmatmul.mubr.f32.gmra.mrb[0].mxu0 %v580
      %v717 = vpop.f32.mrb[0].mxu0
      %v718 = vadd.f32 %v541, %v717
      %v719 = vpop.f32.mrb[0].mxu0
      %720 = vmatprep.mubr.f32.mxu0 0.0
      %721 = vmatmul.mubr.f32.gmra.mrb[0].mxu0 %v583
      %v722 = vpop.f32.mrb[0].mxu0
      %v723 = vadd.f32 %v541, %v722
      %v724 = vpop.f32.mrb[0].mxu0
      %725 = vmatprep.mubr.f32.mxu0 0.0
      %726 = vmatmul.mubr.f32.gmra.mrb[0].mxu0 %v586
      %v727 = vpop.f32.mrb[0].mxu0
      %v728 = vadd.f32 %v541, %v727
      %v729 = vpop.f32.mrb[0].mxu0
      %730 = vmatprep.mubr.f32.mxu0 0.0
      %731 = vmatmul.mubr.f32.gmra.mrb[0].mxu0 %v589
      %v732 = vpop.f32.mrb[0].mxu0
      %v733 = vadd.f32 %v541, %v732
      %v734 = vpop.f32.mrb[0].mxu0
      %735 = vdwg.mxu0
      %v736 = vmax.f32 %v658, 0.0
      %v737 = vmax.f32 %v663, 0.0
      %v738 = vmax.f32 %v668, 0.0
      %v739 = vmax.f32 %v673, 0.0
      %v740 = vmax.f32 %v678, 0.0
      %v741 = vmax.f32 %v683, 0.0
      %v742 = vmax.f32 %v688, 0.0
      %v743 = vmax.f32 %v693, 0.0
      %v744 = vmax.f32 %v698, 0.0
      %v745 = vmax.f32 %v703, 0.0
      %v746 = vmax.f32 %v708, 0.0
      %v747 = vmax.f32 %v713, 0.0
      %v748 = vmax.f32 %v718, 0.0
      %v749 = vmax.f32 %v723, 0.0
      %v750 = vmax.f32 %v728, 0.0
      %v751 = vmax.f32 %v733, 0.0
      %752 = vst.msk [vmem:[%s284] sm:$0xff] %vm322, %v736
      %753 = vst.msk [vmem:[%s284 + $0x8] sm:$0xff] %vm322, %v737
      %754 = vst.msk [vmem:[%s284 + $0x10] sm:$0xff] %vm322, %v738
      %755 = vst.msk [vmem:[%s284 + $0x18] sm:$0xff] %vm322, %v739
      %756 = vst.msk [vmem:[%s284 + $0x20] sm:$0xff] %vm322, %v740
      %757 = vst.msk [vmem:[%s284 + $0x28] sm:$0xff] %vm322, %v741
      %758 = vst.msk [vmem:[%s284 + $0x30] sm:$0xff] %vm322, %v742
      %759 = vst.msk [vmem:[%s284 + $0x38] sm:$0xff] %vm322, %v743
      %760 = vst.msk [vmem:[%s284 + $0x40] sm:$0xff] %vm322, %v744
      %761 = vst.msk [vmem:[%s284 + $0x48] sm:$0xff] %vm322, %v745
      %762 = vst.msk [vmem:[%s284 + $0x50] sm:$0xff] %vm322, %v746
      %763 = vst.msk [vmem:[%s284 + $0x58] sm:$0xff] %vm322, %v747
      %764 = vst.msk [vmem:[%s284 + $0x60] sm:$0xff] %vm322, %v748
      %765 = vst.msk [vmem:[%s284 + $0x68] sm:$0xff] %vm322, %v749
      %766 = vst.msk [vmem:[%s284 + $0x70] sm:$0xff] %vm322, %v750
      %767 = vst.msk [vmem:[%s284 + $0x78] sm:$0xff] %vm322, %v751
      %s768 = smul.u32 16, %s20
      %p769 = scmp.lt.s32.totalorder %s21, 1
      %s770 = scalar_select %p769, %s21, 1
      %p771 = scmp.lt.s32.totalorder %s768, 15
      %s772 = scalar_select %p771, %s768, 15
      %s773 = smul.addr %s770, 16
      %s774 = sadd.s32 %s772, %s773
      %s775 = smul.addr %s774, 8
      %s776 = scalar_lea.vmem %s5, %s775
      // Predicated region
      $region41: #{tpu_custom_call.1} parent=39 // pred_check
        %p777 = pneg %p165
      $region42: #{tpu_custom_call.1} parent=39 // pred_check_branch
        %779 = sbr.rel (%p777) target = $region44
      $region43: #{tpu_custom_call.1} parent=39 // pred_region
        %s780 = smul.u32 16, %s20
      $region44: #{tpu_custom_call.1} parent=39 // pred_fallthru
        _
    $region40: #{tpu_custom_call.1} parent=5 // pred_fallthru
      _
    %p781 = scmp.le.s32.totalorder 2, %s11
    // Predicated region
    $region45: #{tpu_custom_call.1} parent=5 // pred_check
      %p782 = pneg %p781
    $region46: #{tpu_custom_call.1} parent=5 // pred_check_branch
      %784 = sbr.rel (%p782) target = $region48
    $region47: #{tpu_custom_call.1} parent=5 // pred_region
      %s785 = ssub.s32 %s11, 2
      // Predicated region
      $region49: #{tpu_custom_call.1} parent=47 // pred_check
        %p786 = pneg %p171
      $region50: #{tpu_custom_call.1} parent=47 // pred_check_branch
        %788 = sbr.rel (%p786) target = $region52
      $region51: #{tpu_custom_call.1} parent=47 // pred_region
        %s789 = smul.u32 16, %s22
        %p790 = scmp.lt.s32.totalorder %s23, 1
        %s791 = scalar_select %p790, %s23, 1
        %p792 = scmp.lt.s32.totalorder %s789, 15
        %s793 = scalar_select %p792, %s789, 15
        %s794 = smul.addr %s791, 16
        %s795 = sadd.s32 %s793, %s794
        %s796 = smul.addr %s795, 8
        %s797 = scalar_lea.vmem %s5, %s796
      $region52: #{tpu_custom_call.1} parent=47 // pred_fallthru
        _
    $region48: #{tpu_custom_call.1} parent=5 // pred_fallthru
      _
  $region6: #{tpu_custom_call.1} parent=0 // loop_footer
    %s15 = sadd.s32 1, %s11
  $region7: #{tpu_custom_call.1} parent=0 // loop_footer_branch
    %10 = sbr.rel target = $region3
  $region8: #{tpu_custom_call.1} parent=0 // loop_exit
    _

</llo_original>
